<compile_context>
chip_gen: v7x
topology: tpu7x:2x2x1
jax: 0.10.0
libtpu: 0.0.40
codegen_flags: <defaults>
</compile_context>

<pallas_src>
import functools

import jax
import jax.numpy as jnp
from jax.experimental import pallas as pl
from jax.experimental.pallas import tpu as pltpu


def _round_up(v: int, m: int) -> int:
    return ((v + m - 1) // m) * m


def _pick_tile(n: int) -> int:
    """Equal tm==tk tile: up to 512, but keep >=2 i-tiles when N allows."""
    npad128 = _round_up(max(n, 1), 128)
    t = 512
    while t > 128 and npad128 < 2 * t:
        t //= 2
    return min(t, npad128)


def _sage_kernel(a_ref, xs_ref, xd_ref, inv_ref, wl_ref, wr_ref, b1_ref,
                 wo_ref, bo_ref, o_ref, acc_ref, *, tk, xs_resident):
    k = pl.program_id(1)

    @pl.when(k == 0)
    def _init():
        acc_ref[...] = jnp.zeros_like(acc_ref)

    # int8 edge counts -> bf16 (VPU cast is free; the kernel is HBM/DMA-bound),
    # then bf16 x bf16 MXU matmul with f32 accumulation.
    a = a_ref[...].astype(jnp.bfloat16)
    if xs_resident:
        xk = xs_ref[pl.ds(pl.multiple_of(k * tk, tk), tk), :]
    else:
        xk = xs_ref[...]
    acc_ref[...] += jnp.dot(a, xk, preferred_element_type=jnp.float32)

    @pl.when(k == pl.num_programs(1) - 1)
    def _finalize():
        # Mean aggregation: scale the neighbor sum by 1/deg (0 for isolated nodes).
        agg = (acc_ref[...] * inv_ref[...]).astype(jnp.bfloat16)
        # SAGEConv projection: lin_l(agg) + lin_r(x_dst) as two bf16 matmuls
        # (no (tm, 2*fp) f32 concat copy, no f32 upcast of x_dst).
        h = (jnp.dot(agg, wl_ref[...], preferred_element_type=jnp.float32)
             + jnp.dot(xd_ref[...], wr_ref[...], preferred_element_type=jnp.float32)
             + b1_ref[...])
        # ELU (alpha=1); clamp the exp argument so the discarded branch can't overflow.
        h = jnp.where(h > 0.0, h, jnp.exp(jnp.minimum(h, 0.0)) - 1.0)
        out = jnp.dot(h.astype(jnp.bfloat16), wo_ref[...],
                      preferred_element_type=jnp.float32) + bo_ref[...]
        # Padded rows [n:npad) hold bias/ELU "garbage"; the wrapper slices them off.
        o_ref[...] = out.astype(o_ref.dtype)


def graphsage_forward(x, edge_index, params, *, tile=None):
    """x: [N, in_ch] float32, edge_index: [2, E] int32 (row0=src, row1=dst)."""
    n, f = x.shape
    wl, bl, wr, wo, bo = (params["wl"], params["bl"], params["wr"],
                          params["wo"], params["bo"])
    hid = wl.shape[1]
    out_ch = wo.shape[1]

    # ---- padded sizes: lane-dense (x128) channels, tile-aligned node count ----
    fp = _round_up(f, 128)
    hp = _round_up(hid, 128)
    op = _round_up(out_ch, 128)

    tm = tk = tile if tile is not None else _pick_tile(n)
    npad = _round_up(n, tm)

    # ---- glue: int8 edge-count adjacency + f32 inverse in-degree ---------------
    src = edge_index[0]
    dst = edge_index[1]
    counts = jnp.zeros((npad, npad), jnp.int32).at[dst, src].add(1)
    adj = jnp.minimum(counts, 127).astype(jnp.int8)
    deg = counts.sum(axis=1, keepdims=True).astype(jnp.float32)
    inv_deg = jnp.where(deg > 0.0, 1.0 / jnp.maximum(deg, 1.0), 0.0)

    x_p = jnp.zeros((npad, fp), jnp.bfloat16).at[:n, :f].set(x.astype(jnp.bfloat16))

    wl_p = jnp.zeros((fp, hp), jnp.bfloat16).at[:f, :hid].set(wl.astype(jnp.bfloat16))
    wr_p = jnp.zeros((fp, hp), jnp.bfloat16).at[:f, :hid].set(wr.astype(jnp.bfloat16))
    b1_p = jnp.zeros((1, hp), jnp.float32).at[:, :hid].set(bl.reshape(1, -1))
    wo_p = jnp.zeros((hp, op), jnp.bfloat16).at[:hid, :out_ch].set(wo.astype(jnp.bfloat16))
    bo_p = jnp.zeros((1, op), jnp.float32).at[:, :out_ch].set(bo.reshape(1, -1))

    # Keep the full X resident in VMEM when it fits (<= 8 MiB: v7x-safe budget);
    # otherwise stream per-k tiles through the auto double-buffered pipeline.
    xs_resident = npad * fp * 2 <= 8 * 1024 * 1024
    if xs_resident:
        xs_spec = pl.BlockSpec((npad, fp), lambda i, k: (0, 0),
                               pipeline_mode=pl.Buffered(1))
    else:
        xs_spec = pl.BlockSpec((tk, fp), lambda i, k: (k, 0))

    def _const_spec(shape):
        # Grid-invariant operand: single-buffered (its block index never changes).
        return pl.BlockSpec(shape, lambda i, k: (0, 0), pipeline_mode=pl.Buffered(1))

    grid = (npad // tm, npad // tk)

    xs_bytes = npad * fp * 2 if xs_resident else (npad // tm) * npad * fp * 2
    cost = pl.CostEstimate(
        flops=2 * npad * npad * fp + 4 * npad * fp * hp + 2 * npad * hp * op,
        transcendentals=npad * hp,
        bytes_accessed=(npad * npad * 1          # int8 adjacency (dominant)
                        + xs_bytes               # X as neighbor rows (bf16)
                        + npad * fp * 2          # X as dst rows (bf16)
                        + npad * 4               # inverse degree
                        + 2 * fp * hp * 2 + hp * 4 + hp * op * 2 + op * 4
                        + npad * op * 4),        # output
    )

    kernel = functools.partial(_sage_kernel, tk=tk, xs_resident=xs_resident)

    out_padded = pl.pallas_call(
        kernel,
        out_shape=jax.ShapeDtypeStruct((npad, op), jnp.float32),
        grid_spec=pltpu.PrefetchScalarGridSpec(
            num_scalar_prefetch=0,
            grid=grid,
            in_specs=[
                pl.BlockSpec((tm, tk), lambda i, k: (i, k)),   # int8 adjacency tile
                xs_spec,                                       # X as neighbor (src) rows
                pl.BlockSpec((tm, fp), lambda i, k: (i, 0)),   # X as root (dst) rows
                pl.BlockSpec((tm, 1), lambda i, k: (i, 0)),    # 1/deg per dst row
                _const_spec((fp, hp)),                         # W_l (bf16)
                _const_spec((fp, hp)),                         # W_r (bf16)
                _const_spec((1, hp)),                          # b_l
                _const_spec((hp, op)),                         # W_out (bf16)
                _const_spec((1, op)),                          # b_out
            ],
            out_specs=pl.BlockSpec((tm, op), lambda i, k: (i, 0)),
            scratch_shapes=[pltpu.VMEM((tm, fp), jnp.float32)],
        ),
        compiler_params=pltpu.CompilerParams(
            dimension_semantics=("parallel", "arbitrary")),
        cost_estimate=cost,
    )(adj, x_p, x_p, inv_deg, wl_p, wr_p, b1_p, wo_p, bo_p)

    return out_padded[:n, :out_ch]


def init_params(key, in_channels, hidden_channels, out_channels):
    k1, k2, k3 = jax.random.split(key, 3)
    s1 = 1.0 / jnp.sqrt(in_channels)
    s2 = 1.0 / jnp.sqrt(hidden_channels)
    return {
        # stored already-transposed: [in, hidden] so the kernel does X @ W
        "wl": jax.random.normal(k1, (in_channels, hidden_channels), jnp.float32) * s1,
        "bl": jnp.zeros((1, hidden_channels), jnp.float32),
        "wr": jax.random.normal(k2, (in_channels, hidden_channels), jnp.float32) * s1,
        "wo": jax.random.normal(k3, (hidden_channels, out_channels), jnp.float32) * s2,
        "bo": jnp.zeros((1, out_channels), jnp.float32),
    }


def _reference(x, edge_index, params):
    """Pure-JAX reference on the same numeric path (bf16 inputs, f32 accumulation)."""
    n = x.shape[0]
    src, dst = edge_index[0], edge_index[1]
    xb = x.astype(jnp.bfloat16)
    adj = jnp.zeros((n, n), jnp.float32).at[dst, src].add(1.0)
    deg = adj.sum(axis=1, keepdims=True)
    inv = jnp.where(deg > 0.0, 1.0 / jnp.maximum(deg, 1.0), 0.0)
    agg = (jnp.dot(adj.astype(jnp.bfloat16), xb,
                   preferred_element_type=jnp.float32) * inv).astype(jnp.bfloat16)
    h = (jnp.dot(agg, params["wl"].astype(jnp.bfloat16),
                 preferred_element_type=jnp.float32)
         + jnp.dot(xb, params["wr"].astype(jnp.bfloat16),
                   preferred_element_type=jnp.float32)
         + params["bl"])
    h = jnp.where(h > 0.0, h, jnp.exp(jnp.minimum(h, 0.0)) - 1.0)
    return (jnp.dot(h.astype(jnp.bfloat16), params["wo"].astype(jnp.bfloat16),
                    preferred_element_type=jnp.float32) + params["bo"])


if __name__ == "__main__":
    key = jax.random.PRNGKey(0)
    kx, ke, kp = jax.random.split(key, 3)

    N, E = 64, 256
    in_channels, hidden_channels, out_channels = 16, 32, 8

    x = jax.random.normal(kx, (N, in_channels), jnp.float32)
    edge_index = jax.random.randint(ke, (2, E), 0, N, dtype=jnp.int32)
    params = init_params(kp, in_channels, hidden_channels, out_channels)

    out = jax.block_until_ready(graphsage_forward(x, edge_index, params))

    ref = _reference(x, edge_index, params)
    assert out.shape == (N, out_channels)
    max_err = float(jnp.max(jnp.abs(out - ref)))
    assert jnp.allclose(out, ref, atol=2e-3, rtol=2e-3), max_err

    print("KERNEL_OK")
</pallas_src>

<mosaic_0001>
module attributes {stable_mosaic.version = 11 : i64} {
  func.func @_sage_kernel(%arg0: i32, %arg1: i32, %arg2: memref<128x128xi8, #tpu.memory_space<vmem>>, %arg3: memref<128x128xbf16, #tpu.memory_space<vmem>>, %arg4: memref<128x128xbf16, #tpu.memory_space<vmem>>, %arg5: memref<128x1xf32, #tpu.memory_space<vmem>>, %arg6: memref<128x128xbf16, #tpu.memory_space<vmem>>, %arg7: memref<128x128xbf16, #tpu.memory_space<vmem>>, %arg8: memref<1x128xf32, #tpu.memory_space<vmem>>, %arg9: memref<128x128xbf16, #tpu.memory_space<vmem>>, %arg10: memref<1x128xf32, #tpu.memory_space<vmem>>, %arg11: memref<128x128xf32, #tpu.memory_space<vmem>>, %arg12: memref<128x128xf32, #tpu.memory_space<vmem>>) attributes {dimension_semantics = [#tpu.dimension_semantics<parallel>, #tpu.dimension_semantics<arbitrary>], iteration_bounds = array<i64: 1, 1>, scalar_prefetch = 0 : i64, scratch_operands = 1 : i64, tpu.core_type = #tpu.core_type<tc>, window_params = [{transform_indices = @transform_0, window_bounds = array<i64: 128, 128>}, {pipeline_mode = #tpu.pipeline_mode<synchronous>, transform_indices = @transform_1, window_bounds = array<i64: 128, 128>}, {transform_indices = @transform_2, window_bounds = array<i64: 128, 128>}, {transform_indices = @transform_3, window_bounds = array<i64: 128, 1>}, {pipeline_mode = #tpu.pipeline_mode<synchronous>, transform_indices = @transform_4, window_bounds = array<i64: 128, 128>}, {pipeline_mode = #tpu.pipeline_mode<synchronous>, transform_indices = @transform_5, window_bounds = array<i64: 128, 128>}, {pipeline_mode = #tpu.pipeline_mode<synchronous>, transform_indices = @transform_6, window_bounds = array<i64: 1, 128>}, {pipeline_mode = #tpu.pipeline_mode<synchronous>, transform_indices = @transform_7, window_bounds = array<i64: 128, 128>}, {pipeline_mode = #tpu.pipeline_mode<synchronous>, transform_indices = @transform_8, window_bounds = array<i64: 1, 128>}, {transform_indices = @transform_9, window_bounds = array<i64: 128, 128>}]} {
    %c0_i32 = arith.constant 0 : i32
    %0 = arith.cmpi eq, %arg1, %c0_i32 : i32
    %1 = arith.extui %0 : i1 to i32
    %c0_i32_0 = arith.constant 0 : i32
    %2 = arith.cmpi ne, %1, %c0_i32_0 : i32
    scf.if %2 {
      %cst_9 = arith.constant 0.000000e+00 : f32
      %16 = vector.broadcast %cst_9 : f32 to vector<128x128xf32>
      %c0_10 = arith.constant 0 : index
      %c0_11 = arith.constant 0 : index
      %17 = vector.load %arg12[%c0_10, %c0_11] : memref<128x128xf32, #tpu.memory_space<vmem>>, vector<128x128xf32>
      tpu.vector_store %arg12[%c0_10, %c0_11], %16 {strides = array<i32>} : memref<128x128xf32, #tpu.memory_space<vmem>>, vector<128x128xf32>,
    } else {
    }
    %c0 = arith.constant 0 : index
    %c0_1 = arith.constant 0 : index
    %3 = vector.load %arg2[%c0, %c0_1] : memref<128x128xi8, #tpu.memory_space<vmem>>, vector<128x128xi8>
    %4 = arith.sitofp %3 : vector<128x128xi8> to vector<128x128xbf16>
    %c128_i32 = arith.constant 128 : i32
    %5 = arith.muli %arg1, %c128_i32 : i32
    %6 = tpu.assume_multiple %5, 128 : i32
    %7 = arith.index_cast %6 : i32 to index
    %c0_2 = arith.constant 0 : index
    %8 = vector.load %arg3[%7, %c0_2] : memref<128x128xbf16, #tpu.memory_space<vmem>>, vector<128x128xbf16>
    %c0_3 = arith.constant 0 : index
    %c0_4 = arith.constant 0 : index
    %9 = vector.load %arg12[%c0_3, %c0_4] : memref<128x128xf32, #tpu.memory_space<vmem>>, vector<128x128xf32>
    %cst = arith.constant dense<0.000000e+00> : vector<128x128xf32>
    %10 = tpu.matmul %4, %8, %cst {dimension_numbers = #tpu.dot_dimension_numbers<[1], [0], [0], [1], [0, 0, 1, 1], [], []>} : vector<128x128xbf16>, vector<128x128xbf16>, vector<128x128xf32> -> vector<128x128xf32>
    %11 = arith.addf %9, %10 : vector<128x128xf32>
    %c0_5 = arith.constant 0 : index
    %c0_6 = arith.constant 0 : index
    %12 = vector.load %arg12[%c0_5, %c0_6] : memref<128x128xf32, #tpu.memory_space<vmem>>, vector<128x128xf32>
    tpu.vector_store %arg12[%c0_5, %c0_6], %11 {strides = array<i32>} : memref<128x128xf32, #tpu.memory_space<vmem>>, vector<128x128xf32>,
    %c0_i32_7 = arith.constant 0 : i32
    %13 = arith.cmpi eq, %arg1, %c0_i32_7 : i32
    %14 = arith.extui %13 : i1 to i32
    %c0_i32_8 = arith.constant 0 : i32
    %15 = arith.cmpi ne, %14, %c0_i32_8 : i32
    scf.if %15 {
      %c0_9 = arith.constant 0 : index
      %c0_10 = arith.constant 0 : index
      %16 = vector.load %arg12[%c0_9, %c0_10] : memref<128x128xf32, #tpu.memory_space<vmem>>, vector<128x128xf32>
      %c0_11 = arith.constant 0 : index
      %c0_12 = arith.constant 0 : index
      %17 = vector.load %arg5[%c0_11, %c0_12] : memref<128x1xf32, #tpu.memory_space<vmem>>, vector<128x1xf32>
      %18 = vector.broadcast %17 : vector<128x1xf32> to vector<128x128xf32>
      %19 = arith.mulf %16, %18 : vector<128x128xf32>
      %20 = arith.truncf %19 : vector<128x128xf32> to vector<128x128xbf16>
      %c0_13 = arith.constant 0 : index
      %c0_14 = arith.constant 0 : index
      %21 = vector.load %arg6[%c0_13, %c0_14] : memref<128x128xbf16, #tpu.memory_space<vmem>>, vector<128x128xbf16>
      %cst_15 = arith.constant dense<0.000000e+00> : vector<128x128xf32>
      %22 = tpu.matmul %20, %21, %cst_15 {dimension_numbers = #tpu.dot_dimension_numbers<[1], [0], [0], [1], [0, 0, 1, 1], [], []>} : vector<128x128xbf16>, vector<128x128xbf16>, vector<128x128xf32> -> vector<128x128xf32>
      %c0_16 = arith.constant 0 : index
      %c0_17 = arith.constant 0 : index
      %23 = vector.load %arg4[%c0_16, %c0_17] : memref<128x128xbf16, #tpu.memory_space<vmem>>, vector<128x128xbf16>
      %c0_18 = arith.constant 0 : index
      %c0_19 = arith.constant 0 : index
      %24 = vector.load %arg7[%c0_18, %c0_19] : memref<128x128xbf16, #tpu.memory_space<vmem>>, vector<128x128xbf16>
      %cst_20 = arith.constant dense<0.000000e+00> : vector<128x128xf32>
      %25 = tpu.matmul %23, %24, %cst_20 {dimension_numbers = #tpu.dot_dimension_numbers<[1], [0], [0], [1], [0, 0, 1, 1], [], []>} : vector<128x128xbf16>, vector<128x128xbf16>, vector<128x128xf32> -> vector<128x128xf32>
      %26 = arith.addf %22, %25 : vector<128x128xf32>
      %c0_21 = arith.constant 0 : index
      %c0_22 = arith.constant 0 : index
      %27 = vector.load %arg8[%c0_21, %c0_22] : memref<1x128xf32, #tpu.memory_space<vmem>>, vector<1x128xf32>
      %28 = vector.broadcast %27 : vector<1x128xf32> to vector<128x128xf32>
      %29 = arith.addf %26, %28 : vector<128x128xf32>
      %cst_23 = arith.constant 0.000000e+00 : f32
      %30 = vector.broadcast %cst_23 : f32 to vector<128x128xf32>
      %31 = arith.cmpf ogt, %29, %30 : vector<128x128xf32>
      %cst_24 = arith.constant 0.000000e+00 : f32
      %32 = vector.broadcast %cst_24 : f32 to vector<128x128xf32>
      %33 = arith.minimumf %29, %32 : vector<128x128xf32>
      %34 = math.exp %33 : vector<128x128xf32>
      %cst_25 = arith.constant 1.000000e+00 : f32
      %35 = vector.broadcast %cst_25 : f32 to vector<128x128xf32>
      %36 = arith.subf %34, %35 : vector<128x128xf32>
      %37 = arith.select %31, %29, %36 : vector<128x128xi1>, vector<128x128xf32>
      %38 = arith.truncf %37 : vector<128x128xf32> to vector<128x128xbf16>
      %c0_26 = arith.constant 0 : index
      %c0_27 = arith.constant 0 : index
      %39 = vector.load %arg9[%c0_26, %c0_27] : memref<128x128xbf16, #tpu.memory_space<vmem>>, vector<128x128xbf16>
      %cst_28 = arith.constant dense<0.000000e+00> : vector<128x128xf32>
      %40 = tpu.matmul %38, %39, %cst_28 {dimension_numbers = #tpu.dot_dimension_numbers<[1], [0], [0], [1], [0, 0, 1, 1], [], []>} : vector<128x128xbf16>, vector<128x128xbf16>, vector<128x128xf32> -> vector<128x128xf32>
      %c0_29 = arith.constant 0 : index
      %c0_30 = arith.constant 0 : index
      %41 = vector.load %arg10[%c0_29, %c0_30] : memref<1x128xf32, #tpu.memory_space<vmem>>, vector<1x128xf32>
      %42 = vector.broadcast %41 : vector<1x128xf32> to vector<128x128xf32>
      %43 = arith.addf %40, %42 : vector<128x128xf32>
      %c0_31 = arith.constant 0 : index
      %c0_32 = arith.constant 0 : index
      %44 = vector.load %arg11[%c0_31, %c0_32] : memref<128x128xf32, #tpu.memory_space<vmem>>, vector<128x128xf32>
      tpu.vector_store %arg11[%c0_31, %c0_32], %43 {strides = array<i32>} : memref<128x128xf32, #tpu.memory_space<vmem>>, vector<128x128xf32>,
    } else {
    }
    return
  }
  func.func @transform_0(%arg0: i32, %arg1: i32) -> (i32, i32) {
    %c0_i32 = arith.constant 0 : i32
    return %arg0, %arg1 : i32, i32
  }
  func.func @transform_1(%arg0: i32, %arg1: i32) -> (i32, i32) {
    %c0_i32 = arith.constant 0 : i32
    %c0_i32_0 = arith.constant 0 : i32
    %c0_i32_1 = arith.constant 0 : i32
    return %c0_i32, %c0_i32_0 : i32, i32
  }
  func.func @transform_2(%arg0: i32, %arg1: i32) -> (i32, i32) {
    %c0_i32 = arith.constant 0 : i32
    %c0_i32_0 = arith.constant 0 : i32
    return %arg0, %c0_i32 : i32, i32
  }
  func.func @transform_3(%arg0: i32, %arg1: i32) -> (i32, i32) {
    %c0_i32 = arith.constant 0 : i32
    %c0_i32_0 = arith.constant 0 : i32
    return %arg0, %c0_i32 : i32, i32
  }
  func.func @transform_4(%arg0: i32, %arg1: i32) -> (i32, i32) {
    %c0_i32 = arith.constant 0 : i32
    %c0_i32_0 = arith.constant 0 : i32
    %c0_i32_1 = arith.constant 0 : i32
    return %c0_i32, %c0_i32_0 : i32, i32
  }
  func.func @transform_5(%arg0: i32, %arg1: i32) -> (i32, i32) {
    %c0_i32 = arith.constant 0 : i32
    %c0_i32_0 = arith.constant 0 : i32
    %c0_i32_1 = arith.constant 0 : i32
    return %c0_i32, %c0_i32_0 : i32, i32
  }
  func.func @transform_6(%arg0: i32, %arg1: i32) -> (i32, i32) {
    %c0_i32 = arith.constant 0 : i32
    %c0_i32_0 = arith.constant 0 : i32
    %c0_i32_1 = arith.constant 0 : i32
    return %c0_i32, %c0_i32_0 : i32, i32
  }
  func.func @transform_7(%arg0: i32, %arg1: i32) -> (i32, i32) {
    %c0_i32 = arith.constant 0 : i32
    %c0_i32_0 = arith.constant 0 : i32
    %c0_i32_1 = arith.constant 0 : i32
    return %c0_i32, %c0_i32_0 : i32, i32
  }
  func.func @transform_8(%arg0: i32, %arg1: i32) -> (i32, i32) {
    %c0_i32 = arith.constant 0 : i32
    %c0_i32_0 = arith.constant 0 : i32
    %c0_i32_1 = arith.constant 0 : i32
    return %c0_i32, %c0_i32_0 : i32, i32
  }
  func.func @transform_9(%arg0: i32, %arg1: i32) -> (i32, i32) {
    %c0_i32 = arith.constant 0 : i32
    %c0_i32_0 = arith.constant 0 : i32
    return %arg0, %c0_i32 : i32, i32
  }
}

</mosaic_0001>

<llo_original>
// kernel: tpu_custom_call.1
$region0: #{tpu_custom_call.1}
  #allocation0 [shape = 'u32[]', space=smem, size = 0x4, offset = 0x4, fixed_abs, tag = 'smem constant byte address 0x4 - core index']
  #allocation1 [shape = 'u32[144,128]{1,0:T(1,128)}', space=vmem, size = 0x12000, scoped, tag = 'internal scratch']
  #allocation2 [shape = 'f32[128,128]{1,0:T(8,128)}', space=vmem, size = 0x10000, scoped, tag = 'scratch operand']
  %s0 = inlined_call_operand.hbm [shape: s8[128,128], index: 0, kind: input, shape index: {}]
  %s1 = inlined_call_operand.vmem [shape: bf16[128,128], index: 1, kind: input, shape index: {}]
  %s2 = inlined_call_operand.vmem [shape: bf16[128,128], index: 2, kind: input, shape index: {}]
  %s3 = inlined_call_operand.vmem [shape: f32[128,1], index: 3, kind: input, shape index: {}]
  %s4 = inlined_call_operand.hbm [shape: bf16[128,128], index: 4, kind: input, shape index: {}]
  %s5 = inlined_call_operand.hbm [shape: bf16[128,128], index: 5, kind: input, shape index: {}]
  %s6 = inlined_call_operand.vmem [shape: f32[1,128], index: 6, kind: input, shape index: {}]
  %s7 = inlined_call_operand.hbm [shape: bf16[128,128], index: 7, kind: input, shape index: {}]
  %s8 = inlined_call_operand.vmem [shape: f32[1,128], index: 8, kind: input, shape index: {}]
  %s9 = inlined_call_operand.hbm [shape: f32[128,128], index: 9, kind: output, shape index: {}]
  %s10 = sld [smem:[#allocation0]]
  $region70: #{tpu_custom_call.1} parent=0
    _
  %s12 = ssub.s32 1, %s10
  %s13 = scalar_select 0, %s12, %s10
  $region1: #{tpu_custom_call.1} parent=0
    #allocation3 [shape = 'u8[16384]{0}', space=vmem, size = 0x4000, scoped, tag = 'input window, operand 0, single buffered']
    #allocation4 [shape = 's32[1]{0}', space=sflag, size = 0x4, scoped, tag = 'scoped memory for tpu_custom_call.1']
    #allocation5 [shape = 's32[1]{0}', space=sflag, size = 0x4, scoped, tag = 'scoped memory for tpu_custom_call.1']
    #allocation6 [shape = 'u8[32768]{0}', space=vmem, size = 0x8000, scoped, tag = 'input window, operand 4, single buffered']
    #allocation7 [shape = 's32[1]{0}', space=sflag, size = 0x4, scoped, tag = 'scoped memory for tpu_custom_call.1']
    #allocation8 [shape = 'u8[32768]{0}', space=vmem, size = 0x8000, scoped, tag = 'input window, operand 5, single buffered']
    #allocation9 [shape = 'u8[32768]{0}', space=vmem, size = 0x8000, scoped, tag = 'input window, operand 7, single buffered']
    #allocation10 [shape = 's32[1]{0}', space=sflag, size = 0x4, scoped, tag = 'scoped memory for tpu_custom_call.1']
    #allocation11 [shape = 'u8[65536]{0}', space=vmem, size = 0x10000, scoped, tag = 'output window, operand 0, single buffered']
    %14 = vsyncpa [#allocation4], 0
    %15 = vsyncpa [#allocation7], 0
    %16 = vsyncpa [#allocation10], 0
    %17 = vsyncpa [#allocation5], 0
    // Predicated region
    $region2: #{tpu_custom_call.1} parent=1 // pred_check
      _
    $region3: #{tpu_custom_call.1} parent=1 // pred_check_branch
      %19 = sbr.rel (0) target = $region5
    $region4: #{tpu_custom_call.1} parent=1 // pred_region
      %s21 = ssub.s32 512, 512
      %22 = vsyncadd [#allocation4], %s21
      %s23 = sshll.u32 [#allocation3], 4
      %s24 = int_to_ptr.vmem [resolvable:$true] %s23
      %29 = dma.hbm_to_vmem [thread:$0]  %s0, 512, %s24, [#allocation4], 128, 128, 8
    $region5: #{tpu_custom_call.1} parent=1 // pred_fallthru
      _
    // Predicated region
    $region6: #{tpu_custom_call.1} parent=1 // pred_check
      _
    $region7: #{tpu_custom_call.1} parent=1 // pred_check_branch
      %31 = sbr.rel (0) target = $region9
    $region8: #{tpu_custom_call.1} parent=1 // pred_region
      _
    $region9: #{tpu_custom_call.1} parent=1 // pred_fallthru
      _
    // Predicated region
    $region10: #{tpu_custom_call.1} parent=1 // pred_check
      _
    $region11: #{tpu_custom_call.1} parent=1 // pred_check_branch
      %33 = sbr.rel (0) target = $region13
    $region12: #{tpu_custom_call.1} parent=1 // pred_region
      _
    $region13: #{tpu_custom_call.1} parent=1 // pred_fallthru
      _
    // Predicated region
    $region14: #{tpu_custom_call.1} parent=1 // pred_check
      _
    $region15: #{tpu_custom_call.1} parent=1 // pred_check_branch
      %35 = sbr.rel (0) target = $region17
    $region16: #{tpu_custom_call.1} parent=1 // pred_region
      _
    $region17: #{tpu_custom_call.1} parent=1 // pred_fallthru
      _
    // Predicated region
    $region18: #{tpu_custom_call.1} parent=1 // pred_check
      _
    $region19: #{tpu_custom_call.1} parent=1 // pred_check_branch
      %37 = sbr.rel (0) target = $region21
    $region20: #{tpu_custom_call.1} parent=1 // pred_region
      %s39 = ssub.s32 1024, 1024
      %40 = vsyncadd [#allocation7], %s39
      %s41 = sshll.u32 [#allocation6], 4
      %s42 = int_to_ptr.vmem [resolvable:$true] %s41
      %47 = dma.hbm_to_vmem [thread:$0]  %s4, 1024, %s42, [#allocation7], 64, 64, 4
    $region21: #{tpu_custom_call.1} parent=1 // pred_fallthru
      _
    // Predicated region
    $region22: #{tpu_custom_call.1} parent=1 // pred_check
      _
    $region23: #{tpu_custom_call.1} parent=1 // pred_check_branch
      %49 = sbr.rel (0) target = $region25
    $region24: #{tpu_custom_call.1} parent=1 // pred_region
      %s51 = ssub.s32 1024, 1024
      %52 = vsyncadd [#allocation7], %s51
      %s53 = sshll.u32 [#allocation8], 4
      %s54 = int_to_ptr.vmem [resolvable:$true] %s53
      %59 = dma.hbm_to_vmem [thread:$0]  %s5, 1024, %s54, [#allocation7], 64, 64, 4
    $region25: #{tpu_custom_call.1} parent=1 // pred_fallthru
      _
    // Predicated region
    $region26: #{tpu_custom_call.1} parent=1 // pred_check
      _
    $region27: #{tpu_custom_call.1} parent=1 // pred_check_branch
      %61 = sbr.rel (0) target = $region29
    $region28: #{tpu_custom_call.1} parent=1 // pred_region
      _
    $region29: #{tpu_custom_call.1} parent=1 // pred_fallthru
      _
    // Predicated region
    $region30: #{tpu_custom_call.1} parent=1 // pred_check
      _
    $region31: #{tpu_custom_call.1} parent=1 // pred_check_branch
      %63 = sbr.rel (0) target = $region33
    $region32: #{tpu_custom_call.1} parent=1 // pred_region
      %s65 = ssub.s32 1024, 1024
      %66 = vsyncadd [#allocation10], %s65
      %s67 = sshll.u32 [#allocation9], 4
      %s68 = int_to_ptr.vmem [resolvable:$true] %s67
      %73 = dma.hbm_to_vmem [thread:$0]  %s7, 1024, %s68, [#allocation10], 64, 64, 4
    $region33: #{tpu_custom_call.1} parent=1 // pred_fallthru
      _
    // Predicated region
    $region34: #{tpu_custom_call.1} parent=1 // pred_check
      _
    $region35: #{tpu_custom_call.1} parent=1 // pred_check_branch
      %75 = sbr.rel (0) target = $region37
    $region36: #{tpu_custom_call.1} parent=1 // pred_region
      _
    $region37: #{tpu_custom_call.1} parent=1 // pred_fallthru
      _
    // Predicated region
    $region38: #{tpu_custom_call.1} parent=1 // pred_check
      _
    $region39: #{tpu_custom_call.1} parent=1 // pred_check_branch
      %77 = sbr.rel (0) target = $region41
    $region40: #{tpu_custom_call.1} parent=1 // pred_region
      %78 = dma.done [#allocation4], 512
    $region41: #{tpu_custom_call.1} parent=1 // pred_fallthru
      _
    // Predicated region
    $region42: #{tpu_custom_call.1} parent=1 // pred_check
      _
    $region43: #{tpu_custom_call.1} parent=1 // pred_check_branch
      %80 = sbr.rel (0) target = $region45
    $region44: #{tpu_custom_call.1} parent=1 // pred_region
      %81 = dma.done [#allocation7], 1024
    $region45: #{tpu_custom_call.1} parent=1 // pred_fallthru
      _
    // Predicated region
    $region46: #{tpu_custom_call.1} parent=1 // pred_check
      _
    $region47: #{tpu_custom_call.1} parent=1 // pred_check_branch
      %83 = sbr.rel (0) target = $region49
    $region48: #{tpu_custom_call.1} parent=1 // pred_region
      %84 = dma.done [#allocation7], 1024
    $region49: #{tpu_custom_call.1} parent=1 // pred_fallthru
      _
    // Predicated region
    $region50: #{tpu_custom_call.1} parent=1 // pred_check
      _
    $region51: #{tpu_custom_call.1} parent=1 // pred_check_branch
      %86 = sbr.rel (0) target = $region53
    $region52: #{tpu_custom_call.1} parent=1 // pred_region
      %87 = dma.done [#allocation10], 1024
    $region53: #{tpu_custom_call.1} parent=1 // pred_fallthru
      _
    %p89 = scmp.eq.s32.totalorder 0, 0
    // Predicated region
    $region54: #{tpu_custom_call.1} parent=1 // pred_check
      %p90 = pneg %p89
    $region55: #{tpu_custom_call.1} parent=1 // pred_check_branch
      %92 = sbr.rel (%p90) target = $region57
    $region56: #{tpu_custom_call.1} parent=1 // pred_region
      %93 = vst [vmem:[#allocation2] sm:$0xff] 0.0
      %94 = vst [vmem:[#allocation2 + $0x8] sm:$0xff] 0.0
      %95 = vst [vmem:[#allocation2 + $0x10] sm:$0xff] 0.0
      %96 = vst [vmem:[#allocation2 + $0x18] sm:$0xff] 0.0
      %97 = vst [vmem:[#allocation2 + $0x20] sm:$0xff] 0.0
      %98 = vst [vmem:[#allocation2 + $0x28] sm:$0xff] 0.0
      %99 = vst [vmem:[#allocation2 + $0x30] sm:$0xff] 0.0
      %100 = vst [vmem:[#allocation2 + $0x38] sm:$0xff] 0.0
      %101 = vst [vmem:[#allocation2 + $0x40] sm:$0xff] 0.0
      %102 = vst [vmem:[#allocation2 + $0x48] sm:$0xff] 0.0
      %103 = vst [vmem:[#allocation2 + $0x50] sm:$0xff] 0.0
      %104 = vst [vmem:[#allocation2 + $0x58] sm:$0xff] 0.0
      %105 = vst [vmem:[#allocation2 + $0x60] sm:$0xff] 0.0
      %106 = vst [vmem:[#allocation2 + $0x68] sm:$0xff] 0.0
      %107 = vst [vmem:[#allocation2 + $0x70] sm:$0xff] 0.0
      %108 = vst [vmem:[#allocation2 + $0x78] sm:$0xff] 0.0
    $region57: #{tpu_custom_call.1} parent=1 // pred_fallthru
      _
    %v109 = vld [vmem:[#allocation3] sm:$0xff]
    %v110 = vld [vmem:[#allocation3 + $0x8] sm:$0xff]
    %v111 = vld [vmem:[#allocation3 + $0x10] sm:$0xff]
    %v112 = vld [vmem:[#allocation3 + $0x18] sm:$0xff]
    %v113 = vunpack.c.l.s8.bf16 %v109
    %v114 = vunpack.c.h.s8.bf16 %v109
    %v115 = vunpack.c.l.s8.bf16 %v110
    %v116 = vunpack.c.h.s8.bf16 %v110
    %v117 = vunpack.c.l.s8.bf16 %v111
    %v118 = vunpack.c.h.s8.bf16 %v111
    %v119 = vunpack.c.l.s8.bf16 %v112
    %v120 = vunpack.c.h.s8.bf16 %v112
    %s121 = smul.u32 0, 128
    %s122 = sshra.s32 %s121, 3
    %s123 = sand.u32 %s121, 7
    %s124 = smul.addr %s122, 4
    %s125 = scalar_lea.vmem %s1, %s124
    %v126 = vld [vmem:[%s125] sm:$0xf]
    %v127 = vld [vmem:[%s125 + $0x4] sm:$0xf]
    %v128 = vld [vmem:[%s125 + $0x8] sm:$0xf]
    %v129 = vld [vmem:[%s125 + $0xc] sm:$0xf]
    %v130 = vld [vmem:[%s125 + $0x10] sm:$0xf]
    %v131 = vld [vmem:[%s125 + $0x14] sm:$0xf]
    %v132 = vld [vmem:[%s125 + $0x18] sm:$0xf]
    %v133 = vld [vmem:[%s125 + $0x1c] sm:$0xf]
    %v134 = vld [vmem:[%s125 + $0x20] sm:$0xf]
    %v135 = vld [vmem:[%s125 + $0x24] sm:$0xf]
    %v136 = vld [vmem:[%s125 + $0x28] sm:$0xf]
    %v137 = vld [vmem:[%s125 + $0x2c] sm:$0xf]
    %v138 = vld [vmem:[%s125 + $0x30] sm:$0xf]
    %v139 = vld [vmem:[%s125 + $0x34] sm:$0xf]
    %v140 = vld [vmem:[%s125 + $0x38] sm:$0xf]
    %v141 = vld [vmem:[%s125 + $0x3c] sm:$0xf]
    %v142 = vld [vmem:[#allocation2] sm:$0xff]
    %v143 = vld [vmem:[#allocation2 + $0x8] sm:$0xff]
    %v144 = vld [vmem:[#allocation2 + $0x10] sm:$0xff]
    %v145 = vld [vmem:[#allocation2 + $0x18] sm:$0xff]
    %v146 = vld [vmem:[#allocation2 + $0x20] sm:$0xff]
    %v147 = vld [vmem:[#allocation2 + $0x28] sm:$0xff]
    %v148 = vld [vmem:[#allocation2 + $0x30] sm:$0xff]
    %v149 = vld [vmem:[#allocation2 + $0x38] sm:$0xff]
    %v150 = vld [vmem:[#allocation2 + $0x40] sm:$0xff]
    %v151 = vld [vmem:[#allocation2 + $0x48] sm:$0xff]
    %v152 = vld [vmem:[#allocation2 + $0x50] sm:$0xff]
    %v153 = vld [vmem:[#allocation2 + $0x58] sm:$0xff]
    %v154 = vld [vmem:[#allocation2 + $0x60] sm:$0xff]
    %v155 = vld [vmem:[#allocation2 + $0x68] sm:$0xff]
    %v156 = vld [vmem:[#allocation2 + $0x70] sm:$0xff]
    %v157 = vld [vmem:[#allocation2 + $0x78] sm:$0xff]
    %v174 = vunpack.c.l.b16 %v126
    %v175 = vunpack.c.l.b16 %v127
    %v176 = vunpack.c.l.b16 %v128
    %v177 = vunpack.c.l.b16 %v129
    %v178 = vunpack.c.l.b16 %v130
    %v179 = vunpack.c.l.b16 %v131
    %v180 = vunpack.c.l.b16 %v132
    %v181 = vunpack.c.l.b16 %v133
    %v182 = vunpack.c.l.b16 %v134
    %v183 = vunpack.c.l.b16 %v135
    %v184 = vunpack.c.l.b16 %v136
    %v185 = vunpack.c.l.b16 %v137
    %v186 = vunpack.c.l.b16 %v138
    %v187 = vunpack.c.l.b16 %v139
    %v188 = vunpack.c.l.b16 %v140
    %v189 = vunpack.c.l.b16 %v141
    %v190 = vpack.c.b16 %v175, %v174
    %v191 = vpack.c.b16 %v177, %v176
    %v192 = vpack.c.b16 %v179, %v178
    %v193 = vpack.c.b16 %v181, %v180
    %v194 = vpack.c.b16 %v183, %v182
    %v195 = vpack.c.b16 %v185, %v184
    %v196 = vpack.c.b16 %v187, %v186
    %v197 = vpack.c.b16 %v189, %v188
    %206 = vmatprep.subr.bf16.mxu0 0
    %207 = vmatpush1.bf16.msra.mxu0 %v190
    %208 = vmatprep.subr.bf16.mxu0 0
    %209 = vmatpush1.bf16.msra.mxu0 %v191
    %210 = vmatprep.subr.bf16.mxu0 0
    %211 = vmatpush1.bf16.msra.mxu0 %v192
    %212 = vmatprep.subr.bf16.mxu0 0
    %213 = vmatpush1.bf16.msra.mxu0 %v193
    %214 = vmatprep.subr.bf16.mxu0 0
    %215 = vmatpush1.bf16.msra.mxu0 %v194
    %216 = vmatprep.subr.bf16.mxu0 0
    %217 = vmatpush1.bf16.msra.mxu0 %v195
    %218 = vmatprep.subr.bf16.mxu0 0
    %219 = vmatpush1.bf16.msra.mxu0 %v196
    %220 = vmatprep.subr.bf16.mxu0 0
    %221 = vmatpush1.bf16.msra.mxu0 %v197
    %222 = vmatprep.subr.bf16.mxu0 0
    %223 = vmatpush1.bf16.msra.mxu0 0
    %224 = vmatprep.subr.bf16.mxu0 0
    %225 = vmatpush1.bf16.msra.mxu0 0
    %226 = vmatprep.subr.bf16.mxu0 0
    %227 = vmatpush1.bf16.msra.mxu0 0
    %228 = vmatprep.subr.bf16.mxu0 0
    %229 = vmatpush1.bf16.msra.mxu0 0
    %230 = vmatprep.subr.bf16.mxu0 0
    %231 = vmatpush1.bf16.msra.mxu0 0
    %232 = vmatprep.subr.bf16.mxu0 0
    %233 = vmatpush1.bf16.msra.mxu0 0
    %234 = vmatprep.subr.bf16.mxu0 0
    %235 = vmatpush1.bf16.msra.mxu0 0
    %236 = vmatprep.subr.bf16.mxu0 0
    %237 = vmatpush1.bf16.msra.mxu0 0
    %238 = vmatprep.mubr.bf16.mxu0 0
    %239 = vmatmul.mubr.bf16.gmra.mrb[0].mxu0 %v113
    %v240 = vpop.f32.mrb[0].mxu0
    %v241 = vadd.f32 0.0, %v240
    %v242 = vpop.f32.mrb[0].mxu0
    %v243 = vpop.f32.mrb[0].mxu0
    %v244 = vadd.f32 0.0, %v243
    %v245 = vpop.f32.mrb[0].mxu0
    %246 = vmatprep.mubr.bf16.mxu0 0
    %247 = vmatmul.mubr.bf16.gmra.mrb[0].mxu0 %v114
    %v248 = vpop.f32.mrb[0].mxu0
    %v249 = vadd.f32 0.0, %v248
    %v250 = vpop.f32.mrb[0].mxu0
    %v251 = vpop.f32.mrb[0].mxu0
    %v252 = vadd.f32 0.0, %v251
    %v253 = vpop.f32.mrb[0].mxu0
    %254 = vmatprep.mubr.bf16.mxu0 0
    %255 = vmatmul.mubr.bf16.gmra.mrb[0].mxu0 %v115
    %v256 = vpop.f32.mrb[0].mxu0
    %v257 = vadd.f32 0.0, %v256
    %v258 = vpop.f32.mrb[0].mxu0
    %v259 = vpop.f32.mrb[0].mxu0
    %v260 = vadd.f32 0.0, %v259
    %v261 = vpop.f32.mrb[0].mxu0
    %262 = vmatprep.mubr.bf16.mxu0 0
    %263 = vmatmul.mubr.bf16.gmra.mrb[0].mxu0 %v116
    %v264 = vpop.f32.mrb[0].mxu0
    %v265 = vadd.f32 0.0, %v264
    %v266 = vpop.f32.mrb[0].mxu0
    %v267 = vpop.f32.mrb[0].mxu0
    %v268 = vadd.f32 0.0, %v267
    %v269 = vpop.f32.mrb[0].mxu0
    %270 = vmatprep.mubr.bf16.mxu0 0
    %271 = vmatmul.mubr.bf16.gmra.mrb[0].mxu0 %v117
    %v272 = vpop.f32.mrb[0].mxu0
    %v273 = vadd.f32 0.0, %v272
    %v274 = vpop.f32.mrb[0].mxu0
    %v275 = vpop.f32.mrb[0].mxu0
    %v276 = vadd.f32 0.0, %v275
    %v277 = vpop.f32.mrb[0].mxu0
    %278 = vmatprep.mubr.bf16.mxu0 0
    %279 = vmatmul.mubr.bf16.gmra.mrb[0].mxu0 %v118
    %v280 = vpop.f32.mrb[0].mxu0
    %v281 = vadd.f32 0.0, %v280
    %v282 = vpop.f32.mrb[0].mxu0
    %v283 = vpop.f32.mrb[0].mxu0
    %v284 = vadd.f32 0.0, %v283
    %v285 = vpop.f32.mrb[0].mxu0
    %286 = vmatprep.mubr.bf16.mxu0 0
    %287 = vmatmul.mubr.bf16.gmra.mrb[0].mxu0 %v119
    %v288 = vpop.f32.mrb[0].mxu0
    %v289 = vadd.f32 0.0, %v288
    %v290 = vpop.f32.mrb[0].mxu0
    %v291 = vpop.f32.mrb[0].mxu0
    %v292 = vadd.f32 0.0, %v291
    %v293 = vpop.f32.mrb[0].mxu0
    %294 = vmatprep.mubr.bf16.mxu0 0
    %295 = vmatmul.mubr.bf16.gmra.mrb[0].mxu0 %v120
    %v296 = vpop.f32.mrb[0].mxu0
    %v297 = vadd.f32 0.0, %v296
    %v298 = vpop.f32.mrb[0].mxu0
    %v299 = vpop.f32.mrb[0].mxu0
    %v300 = vadd.f32 0.0, %v299
    %v301 = vpop.f32.mrb[0].mxu0
    %302 = vdwg.mxu0
    %v303 = vadd.f32 %v142, %v241
    %v304 = vadd.f32 %v143, %v244
    %v305 = vadd.f32 %v144, %v249
    %v306 = vadd.f32 %v145, %v252
    %v307 = vadd.f32 %v146, %v257
    %v308 = vadd.f32 %v147, %v260
    %v309 = vadd.f32 %v148, %v265
    %v310 = vadd.f32 %v149, %v268
    %v311 = vadd.f32 %v150, %v273
    %v312 = vadd.f32 %v151, %v276
    %v313 = vadd.f32 %v152, %v281
    %v314 = vadd.f32 %v153, %v284
    %v315 = vadd.f32 %v154, %v289
    %v316 = vadd.f32 %v155, %v292
    %v317 = vadd.f32 %v156, %v297
    %v318 = vadd.f32 %v157, %v300
    %319 = vst [vmem:[#allocation2] sm:$0xff] %v303
    %320 = vst [vmem:[#allocation2 + $0x8] sm:$0xff] %v304
    %321 = vst [vmem:[#allocation2 + $0x10] sm:$0xff] %v305
    %322 = vst [vmem:[#allocation2 + $0x18] sm:$0xff] %v306
    %323 = vst [vmem:[#allocation2 + $0x20] sm:$0xff] %v307
    %324 = vst [vmem:[#allocation2 + $0x28] sm:$0xff] %v308
    %325 = vst [vmem:[#allocation2 + $0x30] sm:$0xff] %v309
    %326 = vst [vmem:[#allocation2 + $0x38] sm:$0xff] %v310
    %327 = vst [vmem:[#allocation2 + $0x40] sm:$0xff] %v311
    %328 = vst [vmem:[#allocation2 + $0x48] sm:$0xff] %v312
    %329 = vst [vmem:[#allocation2 + $0x50] sm:$0xff] %v313
    %330 = vst [vmem:[#allocation2 + $0x58] sm:$0xff] %v314
    %331 = vst [vmem:[#allocation2 + $0x60] sm:$0xff] %v315
    %332 = vst [vmem:[#allocation2 + $0x68] sm:$0xff] %v316
    %333 = vst [vmem:[#allocation2 + $0x70] sm:$0xff] %v317
    %334 = vst [vmem:[#allocation2 + $0x78] sm:$0xff] %v318
    // Predicated region
    $region58: #{tpu_custom_call.1} parent=1 // pred_check
      %p335 = pneg %p89
    $region59: #{tpu_custom_call.1} parent=1 // pred_check_branch
      %337 = sbr.rel (%p335) target = $region61
    $region60: #{tpu_custom_call.1} parent=1 // pred_region
      %v338 = vld [vmem:[#allocation2] sm:$0xff]
      %v339 = vld [vmem:[#allocation2 + $0x8] sm:$0xff]
      %v340 = vld [vmem:[#allocation2 + $0x10] sm:$0xff]
      %v341 = vld [vmem:[#allocation2 + $0x18] sm:$0xff]
      %v342 = vld [vmem:[#allocation2 + $0x20] sm:$0xff]
      %v343 = vld [vmem:[#allocation2 + $0x28] sm:$0xff]
      %v344 = vld [vmem:[#allocation2 + $0x30] sm:$0xff]
      %v345 = vld [vmem:[#allocation2 + $0x38] sm:$0xff]
      %v346 = vld [vmem:[#allocation2 + $0x40] sm:$0xff]
      %v347 = vld [vmem:[#allocation2 + $0x48] sm:$0xff]
      %v348 = vld [vmem:[#allocation2 + $0x50] sm:$0xff]
      %v349 = vld [vmem:[#allocation2 + $0x58] sm:$0xff]
      %v350 = vld [vmem:[#allocation2 + $0x60] sm:$0xff]
      %v351 = vld [vmem:[#allocation2 + $0x68] sm:$0xff]
      %v352 = vld [vmem:[#allocation2 + $0x70] sm:$0xff]
      %v353 = vld [vmem:[#allocation2 + $0x78] sm:$0xff]
      %v354 = vld [vmem:[%s3] sm:$0xff]
      %v355 = vld [vmem:[%s3 + $0x8] sm:$0xff]
      %v356 = vld [vmem:[%s3 + $0x10] sm:$0xff]
      %v357 = vld [vmem:[%s3 + $0x18] sm:$0xff]
      %v358 = vld [vmem:[%s3 + $0x20] sm:$0xff]
      %v359 = vld [vmem:[%s3 + $0x28] sm:$0xff]
      %v360 = vld [vmem:[%s3 + $0x30] sm:$0xff]
      %v361 = vld [vmem:[%s3 + $0x38] sm:$0xff]
      %v362 = vld [vmem:[%s3 + $0x40] sm:$0xff]
      %v363 = vld [vmem:[%s3 + $0x48] sm:$0xff]
      %v364 = vld [vmem:[%s3 + $0x50] sm:$0xff]
      %v365 = vld [vmem:[%s3 + $0x58] sm:$0xff]
      %v366 = vld [vmem:[%s3 + $0x60] sm:$0xff]
      %v367 = vld [vmem:[%s3 + $0x68] sm:$0xff]
      %v368 = vld [vmem:[%s3 + $0x70] sm:$0xff]
      %v369 = vld [vmem:[%s3 + $0x78] sm:$0xff]
      %371 = vset.pattern.permute.xlu0 0
      %372 = vperm.xlu0 %371, %v354
      %v373 = vpop.permute.xlu0 %372
      %376 = vset.pattern.permute.xlu0 0
      %377 = vperm.xlu0 %376, %v355
      %v378 = vpop.permute.xlu0 %377
      %381 = vset.pattern.permute.xlu0 0
      %382 = vperm.xlu0 %381, %v356
      %v383 = vpop.permute.xlu0 %382
      %386 = vset.pattern.permute.xlu0 0
      %387 = vperm.xlu0 %386, %v357
      %v388 = vpop.permute.xlu0 %387
      %391 = vset.pattern.permute.xlu0 0
      %392 = vperm.xlu0 %391, %v358
      %v393 = vpop.permute.xlu0 %392
      %396 = vset.pattern.permute.xlu0 0
      %397 = vperm.xlu0 %396, %v359
      %v398 = vpop.permute.xlu0 %397
      %401 = vset.pattern.permute.xlu0 0
      %402 = vperm.xlu0 %401, %v360
      %v403 = vpop.permute.xlu0 %402
      %406 = vset.pattern.permute.xlu0 0
      %407 = vperm.xlu0 %406, %v361
      %v408 = vpop.permute.xlu0 %407
      %411 = vset.pattern.permute.xlu0 0
      %412 = vperm.xlu0 %411, %v362
      %v413 = vpop.permute.xlu0 %412
      %416 = vset.pattern.permute.xlu0 0
      %417 = vperm.xlu0 %416, %v363
      %v418 = vpop.permute.xlu0 %417
      %421 = vset.pattern.permute.xlu0 0
      %422 = vperm.xlu0 %421, %v364
      %v423 = vpop.permute.xlu0 %422
      %426 = vset.pattern.permute.xlu0 0
      %427 = vperm.xlu0 %426, %v365
      %v428 = vpop.permute.xlu0 %427
      %431 = vset.pattern.permute.xlu0 0
      %432 = vperm.xlu0 %431, %v366
      %v433 = vpop.permute.xlu0 %432
      %436 = vset.pattern.permute.xlu0 0
      %437 = vperm.xlu0 %436, %v367
      %v438 = vpop.permute.xlu0 %437
      %441 = vset.pattern.permute.xlu0 0
      %442 = vperm.xlu0 %441, %v368
      %v443 = vpop.permute.xlu0 %442
      %446 = vset.pattern.permute.xlu0 0
      %447 = vperm.xlu0 %446, %v369
      %v448 = vpop.permute.xlu0 %447
      %v450 = vmul.f32 %v338, %v373
      %v451 = vmul.f32 %v339, %v378
      %v452 = vmul.f32 %v340, %v383
      %v453 = vmul.f32 %v341, %v388
      %v454 = vmul.f32 %v342, %v393
      %v455 = vmul.f32 %v343, %v398
      %v456 = vmul.f32 %v344, %v403
      %v457 = vmul.f32 %v345, %v408
      %v458 = vmul.f32 %v346, %v413
      %v459 = vmul.f32 %v347, %v418
      %v460 = vmul.f32 %v348, %v423
      %v461 = vmul.f32 %v349, %v428
      %v462 = vmul.f32 %v350, %v433
      %v463 = vmul.f32 %v351, %v438
      %v464 = vmul.f32 %v352, %v443
      %v465 = vmul.f32 %v353, %v448
      %v466 = vpack.c.bf16 %v451, %v450
      %v467 = vpack.c.bf16 %v453, %v452
      %v468 = vpack.c.bf16 %v455, %v454
      %v469 = vpack.c.bf16 %v457, %v456
      %v470 = vpack.c.bf16 %v459, %v458
      %v471 = vpack.c.bf16 %v461, %v460
      %v472 = vpack.c.bf16 %v463, %v462
      %v473 = vpack.c.bf16 %v465, %v464
      %v474 = vld [vmem:[#allocation6] sm:$0xf]
      %v475 = vld [vmem:[#allocation6 + $0x4] sm:$0xf]
      %v476 = vld [vmem:[#allocation6 + $0x8] sm:$0xf]
      %v477 = vld [vmem:[#allocation6 + $0xc] sm:$0xf]
      %v478 = vld [vmem:[#allocation6 + $0x10] sm:$0xf]
      %v479 = vld [vmem:[#allocation6 + $0x14] sm:$0xf]
      %v480 = vld [vmem:[#allocation6 + $0x18] sm:$0xf]
      %v481 = vld [vmem:[#allocation6 + $0x1c] sm:$0xf]
      %v482 = vld [vmem:[#allocation6 + $0x20] sm:$0xf]
      %v483 = vld [vmem:[#allocation6 + $0x24] sm:$0xf]
      %v484 = vld [vmem:[#allocation6 + $0x28] sm:$0xf]
      %v485 = vld [vmem:[#allocation6 + $0x2c] sm:$0xf]
      %v486 = vld [vmem:[#allocation6 + $0x30] sm:$0xf]
      %v487 = vld [vmem:[#allocation6 + $0x34] sm:$0xf]
      %v488 = vld [vmem:[#allocation6 + $0x38] sm:$0xf]
      %v489 = vld [vmem:[#allocation6 + $0x3c] sm:$0xf]
      %v490 = vld [vmem:[%s2] sm:$0xf]
      %v491 = vld [vmem:[%s2 + $0x4] sm:$0xf]
      %v492 = vld [vmem:[%s2 + $0x8] sm:$0xf]
      %v493 = vld [vmem:[%s2 + $0xc] sm:$0xf]
      %v494 = vld [vmem:[%s2 + $0x10] sm:$0xf]
      %v495 = vld [vmem:[%s2 + $0x14] sm:$0xf]
      %v496 = vld [vmem:[%s2 + $0x18] sm:$0xf]
      %v497 = vld [vmem:[%s2 + $0x1c] sm:$0xf]
      %v498 = vld [vmem:[%s2 + $0x20] sm:$0xf]
      %v499 = vld [vmem:[%s2 + $0x24] sm:$0xf]
      %v500 = vld [vmem:[%s2 + $0x28] sm:$0xf]
      %v501 = vld [vmem:[%s2 + $0x2c] sm:$0xf]
      %v502 = vld [vmem:[%s2 + $0x30] sm:$0xf]
      %v503 = vld [vmem:[%s2 + $0x34] sm:$0xf]
      %v504 = vld [vmem:[%s2 + $0x38] sm:$0xf]
      %v505 = vld [vmem:[%s2 + $0x3c] sm:$0xf]
      %v506 = vld [vmem:[#allocation8] sm:$0xf]
      %v507 = vld [vmem:[#allocation8 + $0x4] sm:$0xf]
      %v508 = vld [vmem:[#allocation8 + $0x8] sm:$0xf]
      %v509 = vld [vmem:[#allocation8 + $0xc] sm:$0xf]
      %v510 = vld [vmem:[#allocation8 + $0x10] sm:$0xf]
      %v511 = vld [vmem:[#allocation8 + $0x14] sm:$0xf]
      %v512 = vld [vmem:[#allocation8 + $0x18] sm:$0xf]
      %v513 = vld [vmem:[#allocation8 + $0x1c] sm:$0xf]
      %v514 = vld [vmem:[#allocation8 + $0x20] sm:$0xf]
      %v515 = vld [vmem:[#allocation8 + $0x24] sm:$0xf]
      %v516 = vld [vmem:[#allocation8 + $0x28] sm:$0xf]
      %v517 = vld [vmem:[#allocation8 + $0x2c] sm:$0xf]
      %v518 = vld [vmem:[#allocation8 + $0x30] sm:$0xf]
      %v519 = vld [vmem:[#allocation8 + $0x34] sm:$0xf]
      %v520 = vld [vmem:[#allocation8 + $0x38] sm:$0xf]
      %v521 = vld [vmem:[#allocation8 + $0x3c] sm:$0xf]
      %v538 = vunpack.c.l.b16 %v490
      %v539 = vunpack.c.l.b16 %v491
      %v540 = vunpack.c.l.b16 %v492
      %v541 = vunpack.c.l.b16 %v493
      %v542 = vunpack.c.l.b16 %v494
      %v543 = vunpack.c.l.b16 %v495
      %v544 = vunpack.c.l.b16 %v496
      %v545 = vunpack.c.l.b16 %v497
      %v546 = vunpack.c.l.b16 %v498
      %v547 = vunpack.c.l.b16 %v499
      %v548 = vunpack.c.l.b16 %v500
      %v549 = vunpack.c.l.b16 %v501
      %v550 = vunpack.c.l.b16 %v502
      %v551 = vunpack.c.l.b16 %v503
      %v552 = vunpack.c.l.b16 %v504
      %v553 = vunpack.c.l.b16 %v505
      %v554 = vpack.c.b16 %v539, %v538
      %v555 = vpack.c.b16 %v541, %v540
      %v556 = vpack.c.b16 %v543, %v542
      %v557 = vpack.c.b16 %v545, %v544
      %v558 = vpack.c.b16 %v547, %v546
      %v559 = vpack.c.b16 %v549, %v548
      %v560 = vpack.c.b16 %v551, %v550
      %v561 = vpack.c.b16 %v553, %v552
      %v586 = vunpack.c.l.b16 %v506
      %v587 = vunpack.c.l.b16 %v507
      %v588 = vunpack.c.l.b16 %v508
      %v589 = vunpack.c.l.b16 %v509
      %v590 = vunpack.c.l.b16 %v510
      %v591 = vunpack.c.l.b16 %v511
      %v592 = vunpack.c.l.b16 %v512
      %v593 = vunpack.c.l.b16 %v513
      %v594 = vunpack.c.l.b16 %v514
      %v595 = vunpack.c.l.b16 %v515
      %v596 = vunpack.c.l.b16 %v516
      %v597 = vunpack.c.l.b16 %v517
      %v598 = vunpack.c.l.b16 %v518
      %v599 = vunpack.c.l.b16 %v519
      %v600 = vunpack.c.l.b16 %v520
      %v601 = vunpack.c.l.b16 %v521
      %v602 = vpack.c.b16 %v587, %v586
      %v603 = vpack.c.b16 %v589, %v588
      %v604 = vpack.c.b16 %v591, %v590
      %v605 = vpack.c.b16 %v593, %v592
      %v606 = vpack.c.b16 %v595, %v594
      %v607 = vpack.c.b16 %v597, %v596
      %v608 = vpack.c.b16 %v599, %v598
      %v609 = vpack.c.b16 %v601, %v600
      %618 = vmatprep.subr.bf16.mxu0 0
      %619 = vmatpush1.bf16.msra.mxu0 %v602
      %620 = vmatprep.subr.bf16.mxu0 0
      %621 = vmatpush1.bf16.msra.mxu0 %v603
      %622 = vmatprep.subr.bf16.mxu0 0
      %623 = vmatpush1.bf16.msra.mxu0 %v604
      %624 = vmatprep.subr.bf16.mxu0 0
      %625 = vmatpush1.bf16.msra.mxu0 %v605
      %626 = vmatprep.subr.bf16.mxu0 0
      %627 = vmatpush1.bf16.msra.mxu0 %v606
      %628 = vmatprep.subr.bf16.mxu0 0
      %629 = vmatpush1.bf16.msra.mxu0 %v607
      %630 = vmatprep.subr.bf16.mxu0 0
      %631 = vmatpush1.bf16.msra.mxu0 %v608
      %632 = vmatprep.subr.bf16.mxu0 0
      %633 = vmatpush1.bf16.msra.mxu0 %v609
      %634 = vmatprep.subr.bf16.mxu0 0
      %635 = vmatpush1.bf16.msra.mxu0 0
      %636 = vmatprep.subr.bf16.mxu0 0
      %637 = vmatpush1.bf16.msra.mxu0 0
      %638 = vmatprep.subr.bf16.mxu0 0
      %639 = vmatpush1.bf16.msra.mxu0 0
      %640 = vmatprep.subr.bf16.mxu0 0
      %641 = vmatpush1.bf16.msra.mxu0 0
      %642 = vmatprep.subr.bf16.mxu0 0
      %643 = vmatpush1.bf16.msra.mxu0 0
      %644 = vmatprep.subr.bf16.mxu0 0
      %645 = vmatpush1.bf16.msra.mxu0 0
      %646 = vmatprep.subr.bf16.mxu0 0
      %647 = vmatpush1.bf16.msra.mxu0 0
      %648 = vmatprep.subr.bf16.mxu0 0
      %649 = vmatpush1.bf16.msra.mxu0 0
      %650 = vmatprep.mubr.bf16.mxu0 0
      %651 = vmatmul.mubr.bf16.gmra.mrb[0].mxu0 %v554
      %v652 = vpop.f32.mrb[0].mxu0
      %v653 = vadd.f32 0.0, %v652
      %v654 = vpop.f32.mrb[0].mxu0
      %v655 = vpop.f32.mrb[0].mxu0
      %v656 = vadd.f32 0.0, %v655
      %v657 = vpop.f32.mrb[0].mxu0
      %658 = vmatprep.mubr.bf16.mxu0 0
      %659 = vmatmul.mubr.bf16.gmra.mrb[0].mxu0 %v555
      %v660 = vpop.f32.mrb[0].mxu0
      %v661 = vadd.f32 0.0, %v660
      %v662 = vpop.f32.mrb[0].mxu0
      %v663 = vpop.f32.mrb[0].mxu0
      %v664 = vadd.f32 0.0, %v663
      %v665 = vpop.f32.mrb[0].mxu0
      %666 = vmatprep.mubr.bf16.mxu0 0
      %667 = vmatmul.mubr.bf16.gmra.mrb[0].mxu0 %v556
      %v668 = vpop.f32.mrb[0].mxu0
      %v669 = vadd.f32 0.0, %v668
      %v670 = vpop.f32.mrb[0].mxu0
      %v671 = vpop.f32.mrb[0].mxu0
      %v672 = vadd.f32 0.0, %v671
      %v673 = vpop.f32.mrb[0].mxu0
      %674 = vmatprep.mubr.bf16.mxu0 0
      %675 = vmatmul.mubr.bf16.gmra.mrb[0].mxu0 %v557
      %v676 = vpop.f32.mrb[0].mxu0
      %v677 = vadd.f32 0.0, %v676
      %v678 = vpop.f32.mrb[0].mxu0
      %v679 = vpop.f32.mrb[0].mxu0
      %v680 = vadd.f32 0.0, %v679
      %v681 = vpop.f32.mrb[0].mxu0
      %682 = vmatprep.mubr.bf16.mxu0 0
      %683 = vmatmul.mubr.bf16.gmra.mrb[0].mxu0 %v558
      %v684 = vpop.f32.mrb[0].mxu0
      %v685 = vadd.f32 0.0, %v684
      %v686 = vpop.f32.mrb[0].mxu0
      %v687 = vpop.f32.mrb[0].mxu0
      %v688 = vadd.f32 0.0, %v687
      %v689 = vpop.f32.mrb[0].mxu0
      %690 = vmatprep.mubr.bf16.mxu0 0
      %691 = vmatmul.mubr.bf16.gmra.mrb[0].mxu0 %v559
      %v692 = vpop.f32.mrb[0].mxu0
      %v693 = vadd.f32 0.0, %v692
      %v694 = vpop.f32.mrb[0].mxu0
      %v695 = vpop.f32.mrb[0].mxu0
      %v696 = vadd.f32 0.0, %v695
      %v697 = vpop.f32.mrb[0].mxu0
      %698 = vmatprep.mubr.bf16.mxu0 0
      %699 = vmatmul.mubr.bf16.gmra.mrb[0].mxu0 %v560
      %v700 = vpop.f32.mrb[0].mxu0
      %v701 = vadd.f32 0.0, %v700
      %v702 = vpop.f32.mrb[0].mxu0
      %v703 = vpop.f32.mrb[0].mxu0
      %v704 = vadd.f32 0.0, %v703
      %v705 = vpop.f32.mrb[0].mxu0
      %706 = vmatprep.mubr.bf16.mxu0 0
      %707 = vmatmul.mubr.bf16.gmra.mrb[0].mxu0 %v561
      %v708 = vpop.f32.mrb[0].mxu0
      %v709 = vadd.f32 0.0, %v708
      %v710 = vpop.f32.mrb[0].mxu0
      %v711 = vpop.f32.mrb[0].mxu0
      %v712 = vadd.f32 0.0, %v711
      %v713 = vpop.f32.mrb[0].mxu0
      %714 = vdwg.mxu0
      %v731 = vunpack.c.l.b16 %v474
      %v732 = vunpack.c.l.b16 %v475
      %v733 = vunpack.c.l.b16 %v476
      %v734 = vunpack.c.l.b16 %v477
      %v735 = vunpack.c.l.b16 %v478
      %v736 = vunpack.c.l.b16 %v479
      %v737 = vunpack.c.l.b16 %v480
      %v738 = vunpack.c.l.b16 %v481
      %v739 = vunpack.c.l.b16 %v482
      %v740 = vunpack.c.l.b16 %v483
      %v741 = vunpack.c.l.b16 %v484
      %v742 = vunpack.c.l.b16 %v485
      %v743 = vunpack.c.l.b16 %v486
      %v744 = vunpack.c.l.b16 %v487
      %v745 = vunpack.c.l.b16 %v488
      %v746 = vunpack.c.l.b16 %v489
      %v747 = vpack.c.b16 %v732, %v731
      %v748 = vpack.c.b16 %v734, %v733
      %v749 = vpack.c.b16 %v736, %v735
      %v750 = vpack.c.b16 %v738, %v737
      %v751 = vpack.c.b16 %v740, %v739
      %v752 = vpack.c.b16 %v742, %v741
      %v753 = vpack.c.b16 %v744, %v743
      %v754 = vpack.c.b16 %v746, %v745
      %763 = vmatprep.subr.bf16.mxu0 0
      %764 = vmatpush1.bf16.msra.mxu0 %v747
      %765 = vmatprep.subr.bf16.mxu0 0
      %766 = vmatpush1.bf16.msra.mxu0 %v748
      %767 = vmatprep.subr.bf16.mxu0 0
      %768 = vmatpush1.bf16.msra.mxu0 %v749
      %769 = vmatprep.subr.bf16.mxu0 0
      %770 = vmatpush1.bf16.msra.mxu0 %v750
      %771 = vmatprep.subr.bf16.mxu0 0
      %772 = vmatpush1.bf16.msra.mxu0 %v751
      %773 = vmatprep.subr.bf16.mxu0 0
      %774 = vmatpush1.bf16.msra.mxu0 %v752
      %775 = vmatprep.subr.bf16.mxu0 0
      %776 = vmatpush1.bf16.msra.mxu0 %v753
      %777 = vmatprep.subr.bf16.mxu0 0
      %778 = vmatpush1.bf16.msra.mxu0 %v754
      %779 = vmatprep.subr.bf16.mxu0 0
      %780 = vmatpush1.bf16.msra.mxu0 0
      %781 = vmatprep.subr.bf16.mxu0 0
      %782 = vmatpush1.bf16.msra.mxu0 0
      %783 = vmatprep.subr.bf16.mxu0 0
      %784 = vmatpush1.bf16.msra.mxu0 0
      %785 = vmatprep.subr.bf16.mxu0 0
      %786 = vmatpush1.bf16.msra.mxu0 0
      %787 = vmatprep.subr.bf16.mxu0 0
      %788 = vmatpush1.bf16.msra.mxu0 0
      %789 = vmatprep.subr.bf16.mxu0 0
      %790 = vmatpush1.bf16.msra.mxu0 0
      %791 = vmatprep.subr.bf16.mxu0 0
      %792 = vmatpush1.bf16.msra.mxu0 0
      %793 = vmatprep.subr.bf16.mxu0 0
      %794 = vmatpush1.bf16.msra.mxu0 0
      %795 = vmatprep.mubr.bf16.mxu0 0
      %796 = vmatmul.mubr.bf16.gmra.mrb[0].mxu0 %v466
      %v797 = vpop.f32.mrb[0].mxu0
      %v798 = vadd.f32 %v653, %v797
      %v799 = vpop.f32.mrb[0].mxu0
      %v800 = vpop.f32.mrb[0].mxu0
      %v801 = vadd.f32 %v656, %v800
      %v802 = vpop.f32.mrb[0].mxu0
      %803 = vmatprep.mubr.bf16.mxu0 0
      %804 = vmatmul.mubr.bf16.gmra.mrb[0].mxu0 %v467
      %v805 = vpop.f32.mrb[0].mxu0
      %v806 = vadd.f32 %v661, %v805
      %v807 = vpop.f32.mrb[0].mxu0
      %v808 = vpop.f32.mrb[0].mxu0
      %v809 = vadd.f32 %v664, %v808
      %v810 = vpop.f32.mrb[0].mxu0
      %811 = vmatprep.mubr.bf16.mxu0 0
      %812 = vmatmul.mubr.bf16.gmra.mrb[0].mxu0 %v468
      %v813 = vpop.f32.mrb[0].mxu0
      %v814 = vadd.f32 %v669, %v813
      %v815 = vpop.f32.mrb[0].mxu0
      %v816 = vpop.f32.mrb[0].mxu0
      %v817 = vadd.f32 %v672, %v816
      %v818 = vpop.f32.mrb[0].mxu0
      %819 = vmatprep.mubr.bf16.mxu0 0
      %820 = vmatmul.mubr.bf16.gmra.mrb[0].mxu0 %v469
      %v821 = vpop.f32.mrb[0].mxu0
      %v822 = vadd.f32 %v677, %v821
      %v823 = vpop.f32.mrb[0].mxu0
      %v824 = vpop.f32.mrb[0].mxu0
      %v825 = vadd.f32 %v680, %v824
      %v826 = vpop.f32.mrb[0].mxu0
      %827 = vmatprep.mubr.bf16.mxu0 0
      %828 = vmatmul.mubr.bf16.gmra.mrb[0].mxu0 %v470
      %v829 = vpop.f32.mrb[0].mxu0
      %v830 = vadd.f32 %v685, %v829
      %v831 = vpop.f32.mrb[0].mxu0
      %v832 = vpop.f32.mrb[0].mxu0
      %v833 = vadd.f32 %v688, %v832
      %v834 = vpop.f32.mrb[0].mxu0
      %835 = vmatprep.mubr.bf16.mxu0 0
      %836 = vmatmul.mubr.bf16.gmra.mrb[0].mxu0 %v471
      %v837 = vpop.f32.mrb[0].mxu0
      %v838 = vadd.f32 %v693, %v837
      %v839 = vpop.f32.mrb[0].mxu0
      %v840 = vpop.f32.mrb[0].mxu0
      %v841 = vadd.f32 %v696, %v840
      %v842 = vpop.f32.mrb[0].mxu0
      %843 = vmatprep.mubr.bf16.mxu0 0
      %844 = vmatmul.mubr.bf16.gmra.mrb[0].mxu0 %v472
      %v845 = vpop.f32.mrb[0].mxu0
      %v846 = vadd.f32 %v701, %v845
      %v847 = vpop.f32.mrb[0].mxu0
      %v848 = vpop.f32.mrb[0].mxu0
      %v849 = vadd.f32 %v704, %v848
      %v850 = vpop.f32.mrb[0].mxu0
      %851 = vmatprep.mubr.bf16.mxu0 0
      %852 = vmatmul.mubr.bf16.gmra.mrb[0].mxu0 %v473
      %v853 = vpop.f32.mrb[0].mxu0
      %v854 = vadd.f32 %v709, %v853
      %v855 = vpop.f32.mrb[0].mxu0
      %v856 = vpop.f32.mrb[0].mxu0
      %v857 = vadd.f32 %v712, %v856
      %v858 = vpop.f32.mrb[0].mxu0
      %859 = vdwg.mxu0
      %v860 = vld [vmem:[%s6] sm:$0x1]
      %v862 = vlaneseq
      %v863 = vshrl.u32 %v862, 7
      %v864 = vsub.s32 0, %v863
      %v865 = vrot.slane %v860, %v864
      %v867 = vadd.f32 %v798, %v865
      %v868 = vadd.f32 %v801, %v865
      %v869 = vadd.f32 %v806, %v865
      %v870 = vadd.f32 %v809, %v865
      %v871 = vadd.f32 %v814, %v865
      %v872 = vadd.f32 %v817, %v865
      %v873 = vadd.f32 %v822, %v865
      %v874 = vadd.f32 %v825, %v865
      %v875 = vadd.f32 %v830, %v865
      %v876 = vadd.f32 %v833, %v865
      %v877 = vadd.f32 %v838, %v865
      %v878 = vadd.f32 %v841, %v865
      %v879 = vadd.f32 %v846, %v865
      %v880 = vadd.f32 %v849, %v865
      %v881 = vadd.f32 %v854, %v865
      %v882 = vadd.f32 %v857, %v865
      %vm883 = vcmp.gt.f32.partialorder %v867, 0.0
      %vm884 = vcmp.gt.f32.partialorder %v868, 0.0
      %vm885 = vcmp.gt.f32.partialorder %v869, 0.0
      %vm886 = vcmp.gt.f32.partialorder %v870, 0.0
      %vm887 = vcmp.gt.f32.partialorder %v871, 0.0
      %vm888 = vcmp.gt.f32.partialorder %v872, 0.0
      %vm889 = vcmp.gt.f32.partialorder %v873, 0.0
      %vm890 = vcmp.gt.f32.partialorder %v874, 0.0
      %vm891 = vcmp.gt.f32.partialorder %v875, 0.0
      %vm892 = vcmp.gt.f32.partialorder %v876, 0.0
      %vm893 = vcmp.gt.f32.partialorder %v877, 0.0
      %vm894 = vcmp.gt.f32.partialorder %v878, 0.0
      %vm895 = vcmp.gt.f32.partialorder %v879, 0.0
      %vm896 = vcmp.gt.f32.partialorder %v880, 0.0
      %vm897 = vcmp.gt.f32.partialorder %v881, 0.0
      %vm898 = vcmp.gt.f32.partialorder %v882, 0.0
      %v899 = vmin.f32 %v867, 0.0
      %v900 = vmin.f32 %v868, 0.0
      %v901 = vmin.f32 %v869, 0.0
      %v902 = vmin.f32 %v870, 0.0
      %v903 = vmin.f32 %v871, 0.0
      %v904 = vmin.f32 %v872, 0.0
      %v905 = vmin.f32 %v873, 0.0
      %v906 = vmin.f32 %v874, 0.0
      %v907 = vmin.f32 %v875, 0.0
      %v908 = vmin.f32 %v876, 0.0
      %v909 = vmin.f32 %v877, 0.0
      %v910 = vmin.f32 %v878, 0.0
      %v911 = vmin.f32 %v879, 0.0
      %v912 = vmin.f32 %v880, 0.0
      %v913 = vmin.f32 %v881, 0.0
      %v914 = vmin.f32 %v882, 0.0
      %v915 = vmul.f32 %v899, 1.442695
      %v916 = vpow.pop %v915
      %v917 = vmul.f32 %v900, 1.442695
      %v918 = vpow.pop %v917
      %v919 = vmul.f32 %v901, 1.442695
      %v920 = vpow.pop %v919
      %v921 = vmul.f32 %v902, 1.442695
      %v922 = vpow.pop %v921
      %v923 = vmul.f32 %v903, 1.442695
      %v924 = vpow.pop %v923
      %v925 = vmul.f32 %v904, 1.442695
      %v926 = vpow.pop %v925
      %v927 = vmul.f32 %v905, 1.442695
      %v928 = vpow.pop %v927
      %v929 = vmul.f32 %v906, 1.442695
      %v930 = vpow.pop %v929
      %v931 = vmul.f32 %v907, 1.442695
      %v932 = vpow.pop %v931
      %v933 = vmul.f32 %v908, 1.442695
      %v934 = vpow.pop %v933
      %v935 = vmul.f32 %v909, 1.442695
      %v936 = vpow.pop %v935
      %v937 = vmul.f32 %v910, 1.442695
      %v938 = vpow.pop %v937
      %v939 = vmul.f32 %v911, 1.442695
      %v940 = vpow.pop %v939
      %v941 = vmul.f32 %v912, 1.442695
      %v942 = vpow.pop %v941
      %v943 = vmul.f32 %v913, 1.442695
      %v944 = vpow.pop %v943
      %v945 = vmul.f32 %v914, 1.442695
      %v946 = vpow.pop %v945
      %v947 = vsub.f32 %v916, 1.0
      %v948 = vsub.f32 %v918, 1.0
      %v949 = vsub.f32 %v920, 1.0
      %v950 = vsub.f32 %v922, 1.0
      %v951 = vsub.f32 %v924, 1.0
      %v952 = vsub.f32 %v926, 1.0
      %v953 = vsub.f32 %v928, 1.0
      %v954 = vsub.f32 %v930, 1.0
      %v955 = vsub.f32 %v932, 1.0
      %v956 = vsub.f32 %v934, 1.0
      %v957 = vsub.f32 %v936, 1.0
      %v958 = vsub.f32 %v938, 1.0
      %v959 = vsub.f32 %v940, 1.0
      %v960 = vsub.f32 %v942, 1.0
      %v961 = vsub.f32 %v944, 1.0
      %v962 = vsub.f32 %v946, 1.0
      %v963 = vsel %vm883, %v867, %v947
      %v964 = vsel %vm884, %v868, %v948
      %v965 = vsel %vm885, %v869, %v949
      %v966 = vsel %vm886, %v870, %v950
      %v967 = vsel %vm887, %v871, %v951
      %v968 = vsel %vm888, %v872, %v952
      %v969 = vsel %vm889, %v873, %v953
      %v970 = vsel %vm890, %v874, %v954
      %v971 = vsel %vm891, %v875, %v955
      %v972 = vsel %vm892, %v876, %v956
      %v973 = vsel %vm893, %v877, %v957
      %v974 = vsel %vm894, %v878, %v958
      %v975 = vsel %vm895, %v879, %v959
      %v976 = vsel %vm896, %v880, %v960
      %v977 = vsel %vm897, %v881, %v961
      %v978 = vsel %vm898, %v882, %v962
      %v979 = vpack.c.bf16 %v964, %v963
      %v980 = vpack.c.bf16 %v966, %v965
      %v981 = vpack.c.bf16 %v968, %v967
      %v982 = vpack.c.bf16 %v970, %v969
      %v983 = vpack.c.bf16 %v972, %v971
      %v984 = vpack.c.bf16 %v974, %v973
      %v985 = vpack.c.bf16 %v976, %v975
      %v986 = vpack.c.bf16 %v978, %v977
      %v987 = vld [vmem:[#allocation9] sm:$0xf]
      %v988 = vld [vmem:[#allocation9 + $0x4] sm:$0xf]
      %v989 = vld [vmem:[#allocation9 + $0x8] sm:$0xf]
      %v990 = vld [vmem:[#allocation9 + $0xc] sm:$0xf]
      %v991 = vld [vmem:[#allocation9 + $0x10] sm:$0xf]
      %v992 = vld [vmem:[#allocation9 + $0x14] sm:$0xf]
      %v993 = vld [vmem:[#allocation9 + $0x18] sm:$0xf]
      %v994 = vld [vmem:[#allocation9 + $0x1c] sm:$0xf]
      %v995 = vld [vmem:[#allocation9 + $0x20] sm:$0xf]
      %v996 = vld [vmem:[#allocation9 + $0x24] sm:$0xf]
      %v997 = vld [vmem:[#allocation9 + $0x28] sm:$0xf]
      %v998 = vld [vmem:[#allocation9 + $0x2c] sm:$0xf]
      %v999 = vld [vmem:[#allocation9 + $0x30] sm:$0xf]
      %v1000 = vld [vmem:[#allocation9 + $0x34] sm:$0xf]
      %v1001 = vld [vmem:[#allocation9 + $0x38] sm:$0xf]
      %v1002 = vld [vmem:[#allocation9 + $0x3c] sm:$0xf]
      %v1003 = vld [vmem:[%s8] sm:$0x1]
      %v1005 = vlaneseq
      %v1006 = vshrl.u32 %v1005, 7
      %v1007 = vsub.s32 0, %v1006
      %v1008 = vrot.slane %v1003, %v1007
      %v1026 = vunpack.c.l.b16 %v987
      %v1027 = vunpack.c.l.b16 %v988
      %v1028 = vunpack.c.l.b16 %v989
      %v1029 = vunpack.c.l.b16 %v990
      %v1030 = vunpack.c.l.b16 %v991
      %v1031 = vunpack.c.l.b16 %v992
      %v1032 = vunpack.c.l.b16 %v993
      %v1033 = vunpack.c.l.b16 %v994
      %v1034 = vunpack.c.l.b16 %v995
      %v1035 = vunpack.c.l.b16 %v996
      %v1036 = vunpack.c.l.b16 %v997
      %v1037 = vunpack.c.l.b16 %v998
      %v1038 = vunpack.c.l.b16 %v999
      %v1039 = vunpack.c.l.b16 %v1000
      %v1040 = vunpack.c.l.b16 %v1001
      %v1041 = vunpack.c.l.b16 %v1002
      %v1042 = vpack.c.b16 %v1027, %v1026
      %v1043 = vpack.c.b16 %v1029, %v1028
      %v1044 = vpack.c.b16 %v1031, %v1030
      %v1045 = vpack.c.b16 %v1033, %v1032
      %v1046 = vpack.c.b16 %v1035, %v1034
      %v1047 = vpack.c.b16 %v1037, %v1036
      %v1048 = vpack.c.b16 %v1039, %v1038
      %v1049 = vpack.c.b16 %v1041, %v1040
      %1058 = vmatprep.subr.bf16.mxu0 0
      %1059 = vmatpush1.bf16.msra.mxu0 %v1042
      %1060 = vmatprep.subr.bf16.mxu0 0
      %1061 = vmatpush1.bf16.msra.mxu0 %v1043
      %1062 = vmatprep.subr.bf16.mxu0 0
      %1063 = vmatpush1.bf16.msra.mxu0 %v1044
      %1064 = vmatprep.subr.bf16.mxu0 0
      %1065 = vmatpush1.bf16.msra.mxu0 %v1045
      %1066 = vmatprep.subr.bf16.mxu0 0
      %1067 = vmatpush1.bf16.msra.mxu0 %v1046
      %1068 = vmatprep.subr.bf16.mxu0 0
      %1069 = vmatpush1.bf16.msra.mxu0 %v1047
      %1070 = vmatprep.subr.bf16.mxu0 0
      %1071 = vmatpush1.bf16.msra.mxu0 %v1048
      %1072 = vmatprep.subr.bf16.mxu0 0
      %1073 = vmatpush1.bf16.msra.mxu0 %v1049
      %1074 = vmatprep.subr.bf16.mxu0 0
      %1075 = vmatpush1.bf16.msra.mxu0 0
      %1076 = vmatprep.subr.bf16.mxu0 0
      %1077 = vmatpush1.bf16.msra.mxu0 0
      %1078 = vmatprep.subr.bf16.mxu0 0
      %1079 = vmatpush1.bf16.msra.mxu0 0
      %1080 = vmatprep.subr.bf16.mxu0 0
      %1081 = vmatpush1.bf16.msra.mxu0 0
      %1082 = vmatprep.subr.bf16.mxu0 0
      %1083 = vmatpush1.bf16.msra.mxu0 0
      %1084 = vmatprep.subr.bf16.mxu0 0
      %1085 = vmatpush1.bf16.msra.mxu0 0
      %1086 = vmatprep.subr.bf16.mxu0 0
      %1087 = vmatpush1.bf16.msra.mxu0 0
      %1088 = vmatprep.subr.bf16.mxu0 0
      %1089 = vmatpush1.bf16.msra.mxu0 0
      %1090 = vmatprep.mubr.bf16.mxu0 0
      %1091 = vmatmul.mubr.bf16.gmra.mrb[0].mxu0 %v979
      %v1092 = vpop.f32.mrb[0].mxu0
      %v1093 = vadd.f32 %v1008, %v1092
      %v1094 = vpop.f32.mrb[0].mxu0
      %v1095 = vpop.f32.mrb[0].mxu0
      %v1096 = vadd.f32 %v1008, %v1095
      %v1097 = vpop.f32.mrb[0].mxu0
      %1098 = vmatprep.mubr.bf16.mxu0 0
      %1099 = vmatmul.mubr.bf16.gmra.mrb[0].mxu0 %v980
      %v1100 = vpop.f32.mrb[0].mxu0
      %v1101 = vadd.f32 %v1008, %v1100
      %v1102 = vpop.f32.mrb[0].mxu0
      %v1103 = vpop.f32.mrb[0].mxu0
      %v1104 = vadd.f32 %v1008, %v1103
      %v1105 = vpop.f32.mrb[0].mxu0
      %1106 = vmatprep.mubr.bf16.mxu0 0
      %1107 = vmatmul.mubr.bf16.gmra.mrb[0].mxu0 %v981
      %v1108 = vpop.f32.mrb[0].mxu0
      %v1109 = vadd.f32 %v1008, %v1108
      %v1110 = vpop.f32.mrb[0].mxu0
      %v1111 = vpop.f32.mrb[0].mxu0
      %v1112 = vadd.f32 %v1008, %v1111
      %v1113 = vpop.f32.mrb[0].mxu0
      %1114 = vmatprep.mubr.bf16.mxu0 0
      %1115 = vmatmul.mubr.bf16.gmra.mrb[0].mxu0 %v982
      %v1116 = vpop.f32.mrb[0].mxu0
      %v1117 = vadd.f32 %v1008, %v1116
      %v1118 = vpop.f32.mrb[0].mxu0
      %v1119 = vpop.f32.mrb[0].mxu0
      %v1120 = vadd.f32 %v1008, %v1119
      %v1121 = vpop.f32.mrb[0].mxu0
      %1122 = vmatprep.mubr.bf16.mxu0 0
      %1123 = vmatmul.mubr.bf16.gmra.mrb[0].mxu0 %v983
      %v1124 = vpop.f32.mrb[0].mxu0
      %v1125 = vadd.f32 %v1008, %v1124
      %v1126 = vpop.f32.mrb[0].mxu0
      %v1127 = vpop.f32.mrb[0].mxu0
      %v1128 = vadd.f32 %v1008, %v1127
      %v1129 = vpop.f32.mrb[0].mxu0
      %1130 = vmatprep.mubr.bf16.mxu0 0
      %1131 = vmatmul.mubr.bf16.gmra.mrb[0].mxu0 %v984
      %v1132 = vpop.f32.mrb[0].mxu0
      %v1133 = vadd.f32 %v1008, %v1132
      %v1134 = vpop.f32.mrb[0].mxu0
      %v1135 = vpop.f32.mrb[0].mxu0
      %v1136 = vadd.f32 %v1008, %v1135
      %v1137 = vpop.f32.mrb[0].mxu0
      %1138 = vmatprep.mubr.bf16.mxu0 0
      %1139 = vmatmul.mubr.bf16.gmra.mrb[0].mxu0 %v985
      %v1140 = vpop.f32.mrb[0].mxu0
      %v1141 = vadd.f32 %v1008, %v1140
      %v1142 = vpop.f32.mrb[0].mxu0
      %v1143 = vpop.f32.mrb[0].mxu0
      %v1144 = vadd.f32 %v1008, %v1143
      %v1145 = vpop.f32.mrb[0].mxu0
      %1146 = vmatprep.mubr.bf16.mxu0 0
      %1147 = vmatmul.mubr.bf16.gmra.mrb[0].mxu0 %v986
      %v1148 = vpop.f32.mrb[0].mxu0
      %v1149 = vadd.f32 %v1008, %v1148
      %v1150 = vpop.f32.mrb[0].mxu0
      %v1151 = vpop.f32.mrb[0].mxu0
      %v1152 = vadd.f32 %v1008, %v1151
      %v1153 = vpop.f32.mrb[0].mxu0
      %1154 = vdwg.mxu0
      %1155 = vst [vmem:[#allocation11] sm:$0xff] %v1093
      %1156 = vst [vmem:[#allocation11 + $0x8] sm:$0xff] %v1096
      %1157 = vst [vmem:[#allocation11 + $0x10] sm:$0xff] %v1101
      %1158 = vst [vmem:[#allocation11 + $0x18] sm:$0xff] %v1104
      %1159 = vst [vmem:[#allocation11 + $0x20] sm:$0xff] %v1109
      %1160 = vst [vmem:[#allocation11 + $0x28] sm:$0xff] %v1112
      %1161 = vst [vmem:[#allocation11 + $0x30] sm:$0xff] %v1117
      %1162 = vst [vmem:[#allocation11 + $0x38] sm:$0xff] %v1120
      %1163 = vst [vmem:[#allocation11 + $0x40] sm:$0xff] %v1125
      %1164 = vst [vmem:[#allocation11 + $0x48] sm:$0xff] %v1128
      %1165 = vst [vmem:[#allocation11 + $0x50] sm:$0xff] %v1133
      %1166 = vst [vmem:[#allocation11 + $0x58] sm:$0xff] %v1136
      %1167 = vst [vmem:[#allocation11 + $0x60] sm:$0xff] %v1141
      %1168 = vst [vmem:[#allocation11 + $0x68] sm:$0xff] %v1144
      %1169 = vst [vmem:[#allocation11 + $0x70] sm:$0xff] %v1149
      %1170 = vst [vmem:[#allocation11 + $0x78] sm:$0xff] %v1152
    $region61: #{tpu_custom_call.1} parent=1 // pred_fallthru
      _
    // Predicated region
    $region62: #{tpu_custom_call.1} parent=1 // pred_check
      _
    $region63: #{tpu_custom_call.1} parent=1 // pred_check_branch
      %1172 = sbr.rel (0) target = $region65
    $region64: #{tpu_custom_call.1} parent=1 // pred_region
      %s1174 = ssub.s32 2048, 2048
      %1175 = vsyncadd [#allocation5], %s1174
      %s1176 = sshll.u32 [#allocation11], 4
      %s1177 = int_to_ptr.vmem [resolvable:$true] %s1176
      %1182 = dma.vmem_to_hbm [thread:$0]  %s1177, 2048, %s9, [#allocation5], 128, 128, 8
    $region65: #{tpu_custom_call.1} parent=1 // pred_fallthru
      _
    // Predicated region
    $region66: #{tpu_custom_call.1} parent=1 // pred_check
      _
    $region67: #{tpu_custom_call.1} parent=1 // pred_check_branch
      %1184 = sbr.rel (0) target = $region69
    $region68: #{tpu_custom_call.1} parent=1 // pred_region
      %1185 = dma.done [#allocation5], 2048
    $region69: #{tpu_custom_call.1} parent=1 // pred_fallthru
      _
    %1186 = vsyncpa [#allocation4], 1
    %1187 = vsyncpa [#allocation7], 1
    %1188 = vsyncpa [#allocation10], 1
    %1189 = vsyncpa [#allocation5], 1

</llo_original>
